<compile_context>
chip_gen: v5e
topology: v5e:2x2
jax: 0.10.0
libtpu: 0.0.40
codegen_flags: <defaults>
</compile_context>

<pallas_src>
import functools
import math

import jax
import jax.numpy as jnp
from jax.experimental import pallas as pl
from jax.experimental.pallas import tpu as pltpu


def _soft_ce_kernel(x_ref, t_ref, out_ref, *, n_rows, tile_m, t_rep, has_remainder):
    """One row-tile: per-row soft cross-entropy reduced to a per-block partial sum."""
    x = x_ref[...].astype(jnp.float32)                 # (tile_m, C)
    t = t_ref[...].astype(jnp.float32)                 # (tile_m, C) or (n_tgt, C) resident

    if t_rep > 1:
        # Resident small target: expand in VMEM/vregs instead of re-reading HBM.
        t = jnp.tile(t, (t_rep, 1))                    # (tile_m, C)

    # Numerically stable log-softmax pieces along the class (lane) axis.
    m = jnp.max(x, axis=-1, keepdims=True)                           # (tile_m, 1)
    lse = jnp.log(jnp.sum(jnp.exp(x - m), axis=-1, keepdims=True))   # (tile_m, 1)

    # sum_c(-t * (x - m - lse)) == sum_c(t) * (m + lse) - sum_c(t * x)
    # TODO(synk): on v7x (compute-bound regime) these lane sums could be pushed
    # to the idle MXU via a dot against a ones matrix; kept on the XLU here.
    sum_t = jnp.sum(t, axis=-1, keepdims=True)
    sum_tx = jnp.sum(t * x, axis=-1, keepdims=True)
    row_loss = sum_t * (m + lse) - sum_tx                            # (tile_m, 1)

    def _store(vals):
        out_ref[...] = jnp.sum(vals, keepdims=True).reshape(1, 1, 1)

    if not has_remainder:
        # Every block is full: plain store, no masking work at all.
        _store(row_loss)
    else:
        i = pl.program_id(0)
        is_last = i == pl.num_programs(0) - 1

        @pl.when(jnp.logical_not(is_last))
        def _():
            _store(row_loss)

        @pl.when(is_last)
        def _():
            # Padded rows of the last partial block hold unspecified data; exp()
            # of garbage may be inf/NaN, so mask with a SELECT (not a multiply).
            row_ids = i * tile_m + jax.lax.broadcasted_iota(
                jnp.int32, row_loss.shape, 0)
            _store(jnp.where(row_ids < n_rows, row_loss, jnp.float32(0.0)))


def _round_up(v, m):
    return ((v + m - 1) // m) * m


def _vmem_capacity_bytes():
    try:
        info = pltpu.get_tpu_info()
        cap = getattr(info, "vmem_capacity_bytes", None)
        if cap:
            return int(cap)
    except Exception:
        pass
    return 64 * 1024 * 1024  # conservative default: assume v7x-sized VMEM


def soft_target_cross_entropy(x, target, *, tile_m=None):
    """Matches SoftTargetCrossEntropy.forward(x, target)."""
    N, C = x.shape
    n_tgt, c_t = target.shape
    assert c_t == C, "x and target must share the class dimension"
    assert N % n_tgt == 0, "x batch must be an integer multiple of target batch"

    x_it = x.dtype.itemsize
    t_it = target.dtype.itemsize

    # ---- Generation-aware VMEM budgets --------------------------------------
    vmem_cap = _vmem_capacity_bytes()
    if vmem_cap >= 96 * 1024 * 1024:       # v5e / v6e: 128 MiB physical VMEM
        work_budget = 48 * 1024 * 1024
        vmem_limit = 96 * 1024 * 1024
    else:                                  # v7x (64 MiB) or unknown
        work_budget = 24 * 1024 * 1024
        vmem_limit = 48 * 1024 * 1024

    # Small repeated target -> keep it fully resident in VMEM (single DMA).
    resident_budget = work_budget // 6
    resident_candidate = (n_tgt != N) and (2 * n_tgt * C * t_it <= resident_budget)

    # ---- Row-tile sizing: byte-based, not a fixed row cap --------------------
    if tile_m is None:
        step_bytes = work_budget // 4      # per-grid-step streamed input bytes
        per_row = C * (x_it + (0 if resident_candidate else t_it))
        tm = step_bytes // max(per_row, 1)
        tm = min(int(tm), 8192, _round_up(N, 8))
        tm = max(8, (tm // 8) * 8)
        # Keep at least two row blocks so the "parallel" axis can split across
        # v7x's two TensorCores (one extra ~0.35us step is noise on 1-TC parts).
        if tm >= _round_up(N, 8) and _round_up(N, 8) >= 16:
            tm = max(8, _round_up(pl.cdiv(N, 2), 8))
        tile_m = tm

    # ---- Target handling -----------------------------------------------------
    t_rep = 1
    if n_tgt == N:
        tgt_spec = pl.BlockSpec((tile_m, C), lambda i: (i, 0))
    else:
        resident = False
        if resident_candidate:
            g = (8 * n_tgt) // math.gcd(8, n_tgt)        # lcm(8, n_tgt)
            tm2 = (tile_m // g) * g                      # keep tile_m % n_tgt == 0
            if tm2 >= 8:
                tile_m = tm2
                t_rep = tile_m // n_tgt
                tgt_spec = pl.BlockSpec((n_tgt, C), lambda i: (0, 0))  # resident
                resident = True
        if not resident:
            if n_tgt % tile_m == 0:
                # Large target: wrap through it instead of materializing N*C in HBM.
                nb = n_tgt // tile_m
                tgt_spec = pl.BlockSpec((tile_m, C), lambda i, nb=nb: (i % nb, 0))
            else:
                # TODO(synk): awkward (target batch, tile) combination — fall back
                # to materializing torch's target.repeat in HBM.
                target = jnp.tile(target, (N // n_tgt, 1))
                tgt_spec = pl.BlockSpec((tile_m, C), lambda i: (i, 0))

    num_blocks = pl.cdiv(N, tile_m)
    has_remainder = (N % tile_m) != 0

    kernel = functools.partial(
        _soft_ce_kernel, n_rows=N, tile_m=tile_m, t_rep=t_rep,
        has_remainder=has_remainder)

    # TODO(synk): add a class-dim (C) tiled online-LSE path for vocab-scale C;
    # the class axis is currently kept untiled.
    block_sums = pl.pallas_call(
        kernel,
        out_shape=jax.ShapeDtypeStruct((num_blocks, 1, 1), jnp.float32),
        grid_spec=pltpu.PrefetchScalarGridSpec(
            num_scalar_prefetch=0,
            grid=(num_blocks,),
            in_specs=[
                pl.BlockSpec((tile_m, C), lambda i: (i, 0)),
                tgt_spec,
            ],
            out_specs=pl.BlockSpec((1, 1, 1), lambda i: (i, 0, 0)),
        ),
        compiler_params=pltpu.CompilerParams(
            dimension_semantics=("parallel",),      # independent row blocks
            vmem_limit_bytes=vmem_limit,
        ),
    )(x, target)

    # Per-block partial sums (padded rows already excluded); divide by true N.
    return jnp.sum(block_sums) / jnp.float32(N)


def _reference(x, target):
    n_rep, n_tgt = x.shape[0], target.shape[0]
    if n_tgt != n_rep:
        target = jnp.tile(target, (n_rep // n_tgt, 1))
    logp = jax.nn.log_softmax(x.astype(jnp.float32), axis=-1)
    return jnp.mean(jnp.sum(-target.astype(jnp.float32) * logp, axis=-1))


if __name__ == "__main__":
    key = jax.random.PRNGKey(0)
    k1, k2, k3, k4, k5 = jax.random.split(key, 5)

    # Case 1: target repeat (N_tgt = N // 2) -> resident-target path, 2 blocks.
    N, C = 16, 128
    x = jax.random.normal(k1, (N, C), dtype=jnp.float32)
    target = jax.nn.softmax(
        jax.random.normal(k2, (N // 2, C), dtype=jnp.float32), axis=-1)
    loss = jax.block_until_ready(soft_target_cross_entropy(x, target))
    ref = _reference(x, target)
    assert jnp.allclose(loss, ref, rtol=1e-5, atol=1e-5), (loss, ref)

    # Case 2: batch not a multiple of the row tile -> remainder masking path.
    N2 = 12
    x2 = jax.random.normal(k3, (N2, C), dtype=jnp.float32)
    target2 = jax.nn.softmax(x2 * 0.3, axis=-1)
    loss2 = jax.block_until_ready(soft_target_cross_entropy(x2, target2))
    ref2 = _reference(x2, target2)
    assert jnp.allclose(loss2, ref2, rtol=1e-5, atol=1e-5), (loss2, ref2)

    # Case 3: resident target expanded in-kernel (t_rep > 1).
    N3, C3, NT3 = 64, 256, 16
    x3 = jax.random.normal(k4, (N3, C3), dtype=jnp.float32)
    target3 = jax.nn.softmax(
        jax.random.normal(k5, (NT3, C3), dtype=jnp.float32), axis=-1)
    loss3 = jax.block_until_ready(soft_target_cross_entropy(x3, target3))
    ref3 = _reference(x3, target3)
    assert jnp.allclose(loss3, ref3, rtol=1e-5, atol=1e-5), (loss3, ref3)

    print("KERNEL_OK")
</pallas_src>

<mosaic_0001>
module attributes {stable_mosaic.version = 11 : i64} {
  func.func @_soft_ce_kernel(%arg0: i32, %arg1: memref<8x128xf32, #tpu.memory_space<vmem>>, %arg2: memref<8x128xf32, #tpu.memory_space<vmem>>, %arg3: memref<1x1x1xf32, #tpu.memory_space<vmem>>) attributes {dimension_semantics = [#tpu.dimension_semantics<parallel>], iteration_bounds = array<i64: 2>, scalar_prefetch = 0 : i64, scratch_operands = 0 : i64, tpu.core_type = #tpu.core_type<tc>, window_params = [{transform_indices = @transform_0, window_bounds = array<i64: 8, 128>}, {pipeline_mode = #tpu.pipeline_mode<synchronous>, transform_indices = @transform_1, window_bounds = array<i64: 8, 128>}, {transform_indices = @transform_2, window_bounds = array<i64: 1, 1, 1>}]} {
    %c0 = arith.constant 0 : index
    %c0_0 = arith.constant 0 : index
    %0 = vector.load %arg1[%c0, %c0_0] : memref<8x128xf32, #tpu.memory_space<vmem>>, vector<8x128xf32>
    %c0_1 = arith.constant 0 : index
    %c0_2 = arith.constant 0 : index
    %1 = vector.load %arg2[%c0_1, %c0_2] : memref<8x128xf32, #tpu.memory_space<vmem>>, vector<8x128xf32>
    %cst = arith.constant dense<0xFF800000> : vector<8xf32>
    %2 = vector.multi_reduction <maximumf>, %0, %cst [1] : vector<8x128xf32> to vector<8xf32>
    %3 = vector.shape_cast %2 : vector<8xf32> to vector<8x1xf32>
    %4 = vector.broadcast %3 : vector<8x1xf32> to vector<8x128xf32>
    %5 = arith.subf %0, %4 : vector<8x128xf32>
    %6 = math.exp %5 : vector<8x128xf32>
    %cst_3 = arith.constant dense<0.000000e+00> : vector<8xf32>
    %7 = vector.multi_reduction <add>, %6, %cst_3 [1] : vector<8x128xf32> to vector<8xf32>
    %8 = vector.shape_cast %7 : vector<8xf32> to vector<8x1xf32>
    %9 = math.log %8 : vector<8x1xf32>
    %cst_4 = arith.constant dense<0.000000e+00> : vector<8xf32>
    %10 = vector.multi_reduction <add>, %1, %cst_4 [1] : vector<8x128xf32> to vector<8xf32>
    %11 = vector.shape_cast %10 : vector<8xf32> to vector<8x1xf32>
    %12 = arith.mulf %1, %0 : vector<8x128xf32>
    %cst_5 = arith.constant dense<0.000000e+00> : vector<8xf32>
    %13 = vector.multi_reduction <add>, %12, %cst_5 [1] : vector<8x128xf32> to vector<8xf32>
    %14 = vector.shape_cast %13 : vector<8xf32> to vector<8x1xf32>
    %15 = arith.addf %3, %9 : vector<8x1xf32>
    %16 = arith.mulf %11, %15 : vector<8x1xf32>
    %17 = arith.subf %16, %14 : vector<8x1xf32>
    %18 = vector.shape_cast %17 : vector<8x1xf32> to vector<1x8x1xf32>
    %cst_6 = arith.constant dense<0.000000e+00> : vector<1xf32>
    %19 = vector.multi_reduction <add>, %18, %cst_6 [1, 2] : vector<1x8x1xf32> to vector<1xf32>
    %20 = vector.shape_cast %19 : vector<1xf32> to vector<1x1x1xf32>
    %21 = vector.extract %20[0, 0, 0] : f32 from vector<1x1x1xf32>
    %22 = vector.broadcast %21 : f32 to vector<1x1xf32>
    %23 = vector.shape_cast %22 : vector<1x1xf32> to vector<1x1x1xf32>
    %c0_7 = arith.constant 0 : index
    %c0_8 = arith.constant 0 : index
    %c0_9 = arith.constant 0 : index
    %24 = vector.load %arg3[%c0_7, %c0_8, %c0_9] : memref<1x1x1xf32, #tpu.memory_space<vmem>>, vector<1x1x1xf32>
    tpu.vector_store %arg3[%c0_7, %c0_8, %c0_9], %23 {strides = array<i32>} : memref<1x1x1xf32, #tpu.memory_space<vmem>>, vector<1x1x1xf32>,
    return
  }
  func.func @transform_0(%arg0: i32) -> (i32, i32) {
    %c0_i32 = arith.constant 0 : i32
    %c0_i32_0 = arith.constant 0 : i32
    return %arg0, %c0_i32 : i32, i32
  }
  func.func @transform_1(%arg0: i32) -> (i32, i32) {
    %c0_i32 = arith.constant 0 : i32
    %c0_i32_0 = arith.constant 0 : i32
    %c0_i32_1 = arith.constant 0 : i32
    return %c0_i32, %c0_i32_0 : i32, i32
  }
  func.func @transform_2(%arg0: i32) -> (i32, i32, i32) {
    %c0_i32 = arith.constant 0 : i32
    %c0_i32_0 = arith.constant 0 : i32
    %c0_i32_1 = arith.constant 0 : i32
    return %arg0, %c0_i32, %c0_i32_0 : i32, i32, i32
  }
}

</mosaic_0001>

<llo_original>
// kernel: tpu_custom_call.1
$region0: #{tpu_custom_call.1}
  #allocation0 [shape = 'u32[]', space=smem, size = 0x4, offset = 0x4, fixed_abs, tag = 'smem constant byte address 0x4 - core index']
  #allocation1 [shape = 'u32[72,128]{1,0:T(1,128)}', space=vmem, size = 0x9000, scoped, tag = 'internal scratch']
  %s0 = inlined_call_operand.hbm [shape: f32[16,128], index: 0, kind: input, shape index: {}]
  %s1 = inlined_call_operand.hbm [shape: f32[8,128], index: 1, kind: input, shape index: {}]
  %s2 = inlined_call_operand.vmem [shape: f32[2,1,1], index: 2, kind: output, shape index: {}]
  %s3 = sld [smem:[#allocation0]]
  $region49: #{tpu_custom_call.1} parent=0
    _
  %s5 = ssub.s32 1, %s3
  %s6 = scalar_select 0, %s5, %s3
  $region1: #{tpu_custom_call.1} parent=0
    #allocation2 [shape = 'u8[8192]{0}', space=vmem, size = 0x2000, scoped, tag = 'input window, operand 0']
    #allocation3 [shape = 's32[2]{0}', space=sflag, size = 0x8, scoped, tag = 'scoped memory for tpu_custom_call.1']
    #allocation4 [shape = 'u8[4096]{0}', space=vmem, size = 0x1000, scoped, tag = 'input window, operand 1, single buffered']
    #allocation5 [shape = 's32[1]{0}', space=sflag, size = 0x4, scoped, tag = 'scoped memory for tpu_custom_call.1']
    %7 = vsyncpa [#allocation3], 0
    %s8 = scalar_lea.sflag [#allocation3], 1
    %9 = vsyncpa %s8, 0
    %10 = vsyncpa [#allocation5], 0
    loop: start=0, step=1, limit=4
    $region2: #{tpu_custom_call.1} parent=1 // loop_pre_header
      _
    $region3: #{tpu_custom_call.1} parent=1 // loop_header
      %s12 = sphi 0, %s16
      %p13 = scmp.ge.s32.totalorder %s12, 4
      %s22 = sphi 0, %s24
      %s25 = sphi 0, %s22
      %s26 = sphi 0, %s25
      %s42 = sphi 0, %s26
      %s46 = sphi 0, %s46
      %s48 = sphi 0, %s46
      %s49 = sphi 0, %s48
      %s63 = sphi 0, %s49
      %s69 = sphi 0, %s71
      %s72 = sphi 0, %s69
      %s73 = sphi 0, %s72
      %s89 = sphi 0, %s73
    $region4: #{tpu_custom_call.1} parent=1 // loop_header_branch
      %15 = sbr.rel (%p13) target = $region8
    $region5: #{tpu_custom_call.1} parent=1 // loop_body
      %s17 = ssub.s32 %s12, 1
      %s18 = ssub.s32 %s12, 2
      %s19 = sadd.s32 %s12, 1
      %s20 = ssub.s32 %s12, %s19
      %p21 = scmp.eq.s32.totalorder %s20, 0
      %s23 = sadd.s32 %s22, 1
      %s24 = scalar_select %p21, %s22, %s23
      %p27 = pneg %p21
      %p28 = scmp.eq.s32.totalorder %s12, 1
      %p29 = por %p27, %p28
      %p30 = scmp.ne.s32.totalorder %s22, %s25
      %p31 = scmp.eq.s32.totalorder %s12, 0
      %p32 = por %p30, %p31
      %p33 = scmp.ne.s32.totalorder %s22, %s25
      %p34 = scmp.eq.s32.totalorder %s17, 1
      %p35 = por %p33, %p34
      %p36 = scmp.ne.s32.totalorder %s25, %s26
      %p37 = scmp.eq.s32.totalorder %s17, 0
      %p38 = por %p36, %p37
      %p39 = scmp.ne.s32.totalorder %s25, %s26
      %p40 = scmp.eq.s32.totalorder %s18, 1
      %p41 = por %p39, %p40
      %p43 = scmp.ne.s32.totalorder %s26, %s42
      %p44 = scmp.eq.s32.totalorder %s18, 0
      %p45 = por %p43, %p44
      %s47 = sadd.s32 %s46, 1
      %p50 = scmp.eq.s32.totalorder %s12, 1
      %p51 = scmp.ne.s32.totalorder %s46, %s48
      %p52 = scmp.eq.s32.totalorder %s12, 0
      %p53 = por %p51, %p52
      %p54 = scmp.ne.s32.totalorder %s46, %s48
      %p55 = scmp.eq.s32.totalorder %s17, 1
      %p56 = por %p54, %p55
      %p57 = scmp.ne.s32.totalorder %s48, %s49
      %p58 = scmp.eq.s32.totalorder %s17, 0
      %p59 = por %p57, %p58
      %p60 = scmp.ne.s32.totalorder %s48, %s49
      %p61 = scmp.eq.s32.totalorder %s18, 1
      %p62 = por %p60, %p61
      %p64 = scmp.ne.s32.totalorder %s49, %s63
      %p65 = scmp.eq.s32.totalorder %s18, 0
      %p66 = por %p64, %p65
      %s67 = ssub.s32 %s12, %s19
      %p68 = scmp.eq.s32.totalorder %s67, 0
      %s70 = sadd.s32 %s69, 1
      %s71 = scalar_select %p68, %s69, %s70
      %p74 = pneg %p68
      %p75 = scmp.eq.s32.totalorder %s12, 1
      %p76 = por %p74, %p75
      %p77 = scmp.ne.s32.totalorder %s69, %s72
      %p78 = scmp.eq.s32.totalorder %s12, 0
      %p79 = por %p77, %p78
      %p80 = scmp.ne.s32.totalorder %s69, %s72
      %p81 = scmp.eq.s32.totalorder %s17, 1
      %p82 = por %p80, %p81
      %p83 = scmp.ne.s32.totalorder %s72, %s73
      %p84 = scmp.eq.s32.totalorder %s17, 0
      %p85 = por %p83, %p84
      %p86 = scmp.ne.s32.totalorder %s72, %s73
      %p87 = scmp.eq.s32.totalorder %s18, 1
      %p88 = por %p86, %p87
      %p90 = scmp.ne.s32.totalorder %s73, %s89
      %p91 = scmp.eq.s32.totalorder %s18, 0
      %p92 = por %p90, %p91
      %p93 = scmp.le.s32.totalorder 1, %s12
      %p94 = scmp.lt.s32.totalorder %s12, 3
      %p95 = pnand %p93, %p94
      %p96 = pneg %p95
      // Predicated region
      $region9: #{tpu_custom_call.1} parent=5 // pred_check
        _
      $region10: #{tpu_custom_call.1} parent=5 // pred_check_branch
        %98 = sbr.rel (%p95) target = $region12
      $region11: #{tpu_custom_call.1} parent=5 // pred_region
        %s99 = ssub.s32 %s12, 1
        // Predicated region
        $region13: #{tpu_custom_call.1} parent=11 // pred_check
          %p100 = pneg %p59
        $region14: #{tpu_custom_call.1} parent=11 // pred_check_branch
          %102 = sbr.rel (%p100) target = $region16
        $region15: #{tpu_custom_call.1} parent=11 // pred_region
          %104 = vsyncadd [#allocation5], 0
          %s106 = sshll.u32 %s1, 4
          %s107 = int_to_ptr.hbm [resolvable:$true] %s106
          %s108 = sshll.u32 [#allocation4], 4
          %s109 = int_to_ptr.vmem [resolvable:$true] %s108
          %111 = dma.hbm_to_vmem [thread:$0]  %s107, 128, %s109, [#allocation5]
        $region16: #{tpu_custom_call.1} parent=11 // pred_fallthru
          _
      $region12: #{tpu_custom_call.1} parent=5 // pred_fallthru
        _
      %p112 = scmp.lt.s32.totalorder %s12, 2
      // Predicated region
      $region17: #{tpu_custom_call.1} parent=5 // pred_check
        %p113 = pneg %p112
      $region18: #{tpu_custom_call.1} parent=5 // pred_check_branch
        %115 = sbr.rel (%p113) target = $region20
      $region19: #{tpu_custom_call.1} parent=5 // pred_region
        // Predicated region
        $region21: #{tpu_custom_call.1} parent=19 // pred_check
          %p116 = pneg %p32
        $region22: #{tpu_custom_call.1} parent=19 // pred_check_branch
          %118 = sbr.rel (%p116) target = $region24
        $region23: #{tpu_custom_call.1} parent=19 // pred_region
          %s119 = sand.u32 %s22, 1
          %s120 = scalar_lea.sflag [#allocation3], %s119
          %s121 = sand.u32 %s22, 1
          %s122 = smul.addr %s121, 8
          %s123 = scalar_lea.vmem [#allocation2], %s122
          %125 = vsyncadd %s120, 0
          %s126 = smul.addr %s12, 8
          %s127 = scalar_lea.hbm %s0, %s126
          %s129 = sshll.u32 %s127, 4
          %s130 = int_to_ptr.hbm [resolvable:$true] %s129
          %s131 = sshll.u32 %s123, 4
          %s132 = int_to_ptr.vmem [resolvable:$true] %s131
          %134 = dma.hbm_to_vmem [thread:$0]  %s130, 128, %s132, %s120
        $region24: #{tpu_custom_call.1} parent=19 // pred_fallthru
          _
      $region20: #{tpu_custom_call.1} parent=5 // pred_fallthru
        _
      %p135 = scmp.le.s32.totalorder 1, %s12
      %p136 = scmp.lt.s32.totalorder %s12, 3
      %p137 = pnand %p135, %p136
      %p138 = pneg %p137
      // Predicated region
      $region25: #{tpu_custom_call.1} parent=5 // pred_check
        _
      $region26: #{tpu_custom_call.1} parent=5 // pred_check_branch
        %140 = sbr.rel (%p137) target = $region28
      $region27: #{tpu_custom_call.1} parent=5 // pred_region
        %s141 = ssub.s32 %s12, 1
        %s142 = sand.u32 %s25, 1
        %s143 = scalar_lea.sflag [#allocation3], %s142
        %s144 = sand.u32 %s25, 1
        %s145 = smul.addr %s144, 8
        %s146 = scalar_lea.vmem [#allocation2], %s145
        // Predicated region
        $region29: #{tpu_custom_call.1} parent=27 // pred_check
          %p147 = pneg %p38
        $region30: #{tpu_custom_call.1} parent=27 // pred_check_branch
          %149 = sbr.rel (%p147) target = $region32
        $region31: #{tpu_custom_call.1} parent=27 // pred_region
          %151 = dma.done %s143, 128
        $region32: #{tpu_custom_call.1} parent=27 // pred_fallthru
          _
        // Predicated region
        $region33: #{tpu_custom_call.1} parent=27 // pred_check
          %p152 = pneg %p59
        $region34: #{tpu_custom_call.1} parent=27 // pred_check_branch
          %154 = sbr.rel (%p152) target = $region36
        $region35: #{tpu_custom_call.1} parent=27 // pred_region
          %156 = dma.done [#allocation5], 128
        $region36: #{tpu_custom_call.1} parent=27 // pred_fallthru
          _
        %s157 = sand.u32 %s25, 1
        %s158 = scalar_lea.sflag [#allocation3], %s157
        %s159 = sand.u32 %s25, 1
        %s160 = smul.addr %s159, 8
        %s161 = scalar_lea.vmem [#allocation2], %s160
        %p162 = pneg %p38
        %p163 = pneg %p35
        %p164 = pneg %p59
        %p165 = pneg %p56
        %p166 = pneg %p85
        %p167 = pneg %p82
        %p168 = scmp.lt.s32.totalorder %s17, 1
        %s169 = scalar_select %p168, %s17, 1
        %s170 = scalar_lea.vmem %s2, %s169
        %p171 = scmp.lt.s32.totalorder %s17, 1
        %s172 = scalar_select %p171, %s17, 1
        %s173 = scalar_lea.vmem %s2, %s172
        %v174 = vld [vmem:[%s146] sm:$0xff]
        %v175 = vld [vmem:[#allocation4] sm:$0xff]
        %176 = vmax.xlane.f32.xlu0 %v174
        %v177 = vpop.xlane.xlu0 %176
        %v178 = vsub.f32 %v174, %v177
        %v179 = vmul.f32 %v178, 1.442695
        %v180 = vpow.pop %v179
        %181 = vadd.xlane.f32.xlu0 %v180
        %v182 = vpop.xlane.xlu0 %181
        %v183 = vlog2.pop %v182
        %v184 = vmul.f32 %v183, 0.6931472
        %185 = vadd.xlane.f32.xlu0 %v175
        %v186 = vpop.xlane.xlu0 %185
        %v187 = vmul.f32 %v175, %v174
        %188 = vadd.xlane.f32.xlu0 %v187
        %v189 = vpop.xlane.xlu0 %188
        %v190 = vadd.f32 %v177, %v184
        %v191 = vmul.f32 %v186, %v190
        %v192 = vsub.f32 %v191, %v189
        %vm193 = vcmask 7168
        %v194 = vsel %vm193, %v192, 0.0
        %195 = vadd.xlane.f32.xlu0 %v194
        %v196 = vpop.xlane.xlu0 %195
        %v197 = vrot.slane %v196, 4
        %v198 = vadd.f32 %v196, %v197
        %v199 = vrot.slane %v198, 2
        %v200 = vadd.f32 %v198, %v199
        %v201 = vrot.slane %v200, 1
        %v202 = vadd.f32 %v200, %v201
        %s203 = vtos %v202
        %v204 = vstv %s203
        %vm205 = vcmask 0
        %206 = vst.msk [vmem:[%s173] sm:$0x1] %vm205, %v204
        %p207 = scmp.lt.s32.totalorder %s17, 1
        %s208 = scalar_select %p207, %s17, 1
        %s209 = scalar_lea.vmem %s2, %s208
        // Predicated region
        $region37: #{tpu_custom_call.1} parent=27 // pred_check
          %p210 = pneg %p82
        $region38: #{tpu_custom_call.1} parent=27 // pred_check_branch
          %212 = sbr.rel (%p210) target = $region40
        $region39: #{tpu_custom_call.1} parent=27 // pred_region
          _
        $region40: #{tpu_custom_call.1} parent=27 // pred_fallthru
          _
      $region28: #{tpu_custom_call.1} parent=5 // pred_fallthru
        _
      %p213 = scmp.le.s32.totalorder 2, %s12
      // Predicated region
      $region41: #{tpu_custom_call.1} parent=5 // pred_check
        %p214 = pneg %p213
      $region42: #{tpu_custom_call.1} parent=5 // pred_check_branch
        %216 = sbr.rel (%p214) target = $region44
      $region43: #{tpu_custom_call.1} parent=5 // pred_region
        %s217 = ssub.s32 %s12, 2
        // Predicated region
        $region45: #{tpu_custom_call.1} parent=43 // pred_check
          %p218 = pneg %p88
        $region46: #{tpu_custom_call.1} parent=43 // pred_check_branch
          %220 = sbr.rel (%p218) target = $region48
        $region47: #{tpu_custom_call.1} parent=43 // pred_region
          %p221 = scmp.lt.s32.totalorder %s18, 1
          %s222 = scalar_select %p221, %s18, 1
          %s223 = scalar_lea.vmem %s2, %s222
        $region48: #{tpu_custom_call.1} parent=43 // pred_fallthru
          _
      $region44: #{tpu_custom_call.1} parent=5 // pred_fallthru
        _
    $region6: #{tpu_custom_call.1} parent=1 // loop_footer
      %s16 = sadd.s32 1, %s12
    $region7: #{tpu_custom_call.1} parent=1 // loop_footer_branch
      %11 = sbr.rel target = $region3
    $region8: #{tpu_custom_call.1} parent=1 // loop_exit
      _
    %224 = vsyncpa [#allocation3], 1
    %s225 = scalar_lea.sflag [#allocation3], 1
    %226 = vsyncpa %s225, 1
    %227 = vsyncpa [#allocation5], 1

</llo_original>
